<compile_context>
chip_gen: v7x
topology: tpu7x:2x2x1
jax: 0.10.0
libtpu: 0.0.40
codegen_flags: <defaults>
</compile_context>

<pallas_src>
import math

import jax
import jax.numpy as jnp
from jax.experimental import pallas as pl
from jax.experimental.pallas import tpu as pltpu


def _copy_kernel(x_ref, o_ref):
    # Identity copy of the current lane/sublane-dense tile.
    o_ref[...] = x_ref[...]


_LANE_CANDIDATES = (2048, 1024, 512, 256, 128)


def _sublane_multiple(dtype):
    """Dtype-aware sublane packing: f32 -> 8, bf16 -> 16, int8/fp8 -> 32."""
    itemsize = jnp.dtype(dtype).itemsize
    return max(8, 32 // max(1, itemsize))


def _pick_2d_layout(total_elems, sub):
    """Pick a lane-dense (rows, cols) factorization of total_elems.

    cols is a multiple of 128 (full lane occupancy); rows preferably a
    multiple of the dtype-aware sublane multiple (full packed-vreg occupancy
    -> unmasked vst).  Returns None if total_elems is not a multiple of 128.
    """
    fallback = None
    for cols in _LANE_CANDIDATES:
        if total_elems % cols == 0:
            rows = total_elems // cols
            if rows % sub == 0:
                return rows, cols          # lane- AND sublane-dense
            if fallback is None:
                fallback = (rows, cols)    # lane-dense only
    return fallback


def _pick_row_tile(rows, cols, itemsize, sub, target_block_bytes):
    """Row tile: multiple of `sub`, block bytes <= target, >= 2 grid steps.

    Uses a cdiv grid, so `rows` need not be divisible by the tile; the last
    block may be partial (masked stores handle the tail).
    """
    if rows <= sub:
        # Full-extent first dim (always legal); cols <= 2048 so block is tiny.
        return rows
    max_rows = max(sub, (target_block_bytes // (cols * itemsize)) // sub * sub)
    row_tile = min(max_rows, (rows // sub) * sub)
    # Megacore (v7x): make sure there are at least 2 grid steps when possible
    # so both TensorCores get work.  No-op on v5e/v6e.
    if row_tile >= rows and rows >= 2 * sub:
        row_tile = max(sub, (rows // 2) // sub * sub)
    return row_tile


def reshape_forward(x, target_shape, *,
                    use_pallas=True,
                    min_pallas_bytes=4 << 20,
                    target_block_bytes=8 << 20,
                    donate_input=False):
    """Pallas-backed equivalent of Reshape(target_shape).forward(x)."""
    batch = x.shape[0]
    flat = math.prod(x.shape[1:]) if x.ndim > 1 else 1
    assert flat == math.prod(target_shape), (x.shape, target_shape)

    itemsize = jnp.dtype(x.dtype).itemsize
    total = batch * flat
    total_bytes = total * itemsize

    # Fast path (default for small inputs): reshape is metadata-only in XLA.
    if not use_pallas or total_bytes < min_pallas_bytes:
        return x.reshape(batch, *target_shape)

    sub = _sublane_multiple(x.dtype)
    layout = _pick_2d_layout(total, sub)
    if layout is None:
        # Not a multiple of 128 lanes: the free metadata reshape wins.
        return x.reshape(batch, *target_shape)

    rows, cols = layout
    row_tile = _pick_row_tile(rows, cols, itemsize, sub, target_block_bytes)
    n_steps = pl.cdiv(rows, row_tile)
    block_bytes = row_tile * cols * itemsize

    # Metadata-only view: row-major element order is preserved, so the kernel
    # output reshaped to (batch, *target_shape) matches torch.reshape exactly.
    x2d = x.reshape(rows, cols)

    alias_kwargs = {}
    if donate_input:
        # Only alias when x is actually donated by the caller; otherwise XLA
        # inserts a defensive copy of the whole input (extra HBM traffic).
        alias_kwargs["input_output_aliases"] = {0: 0}

    out2d = pl.pallas_call(
        _copy_kernel,
        out_shape=jax.ShapeDtypeStruct((rows, cols), x.dtype),
        grid_spec=pltpu.PrefetchScalarGridSpec(
            num_scalar_prefetch=0,
            grid=(n_steps,),
            in_specs=[pl.BlockSpec((row_tile, cols), lambda i: (i, 0))],
            out_specs=pl.BlockSpec((row_tile, cols), lambda i: (i, 0)),
        ),
        # Advisory: this call is a pure memcpy (read + write the tensor once).
        cost_estimate=pl.CostEstimate(
            flops=0,
            transcendentals=0,
            bytes_accessed=2 * rows * cols * itemsize,
        ),
        compiler_params=pltpu.CompilerParams(
            dimension_semantics=("parallel",),
            # 2x double-buffered input + 2x double-buffered output blocks plus
            # headroom, capped under v7x's 64 MiB physical VMEM.
            vmem_limit_bytes=int(min(48 << 20, max(16 << 20, 6 * block_bytes))),
        ),
        **alias_kwargs,
    )(x2d)

    # Final metadata reshape to the requested target shape.
    return out2d.reshape(batch, *target_shape)


if __name__ == "__main__":
    key = jax.random.PRNGKey(0)
    # Small NCHW input: batch=2, channels=4, spatial=16x16
    x = jax.random.normal(key, (2, 4, 16, 16), dtype=jnp.float32)

    # Reshape module configured with shape=[16, 64]  (4*16*16 == 16*64)
    target_shape = [16, 64]

    # Exercise the Pallas copy kernel once on-device (bypass the small-tensor
    # early exit so the kernel itself actually runs at this tiny shape).
    y = reshape_forward(x, target_shape, min_pallas_bytes=0)
    jax.block_until_ready(y)

    # Default path for this small input: zero-copy metadata reshape.
    y_auto = reshape_forward(x, target_shape)
    jax.block_until_ready(y_auto)

    # Correctness check against plain JAX reshape (== torch.reshape semantics
    # for a contiguous tensor).
    ref = x.reshape(x.shape[0], *target_shape)
    assert y.shape == ref.shape, (y.shape, ref.shape)
    assert y.dtype == ref.dtype
    assert bool(jnp.array_equal(y, ref))
    assert bool(jnp.array_equal(y_auto, ref))

    print("KERNEL_OK")
</pallas_src>

<mosaic_0001>
module attributes {stable_mosaic.version = 11 : i64} {
  func.func @_copy_kernel(%arg0: i32, %arg1: memref<8x256xf32, #tpu.memory_space<vmem>>, %arg2: memref<8x256xf32, #tpu.memory_space<vmem>>) attributes {dimension_semantics = [#tpu.dimension_semantics<parallel>], iteration_bounds = array<i64: 1>, scalar_prefetch = 0 : i64, scratch_operands = 0 : i64, tpu.core_type = #tpu.core_type<tc>, window_params = [{transform_indices = @transform_0, window_bounds = array<i64: 8, 256>}, {transform_indices = @transform_1, window_bounds = array<i64: 8, 256>}]} {
    %c0 = arith.constant 0 : index
    %c0_0 = arith.constant 0 : index
    %0 = vector.load %arg1[%c0, %c0_0] : memref<8x256xf32, #tpu.memory_space<vmem>>, vector<8x256xf32>
    %c0_1 = arith.constant 0 : index
    %c0_2 = arith.constant 0 : index
    %1 = vector.load %arg2[%c0_1, %c0_2] : memref<8x256xf32, #tpu.memory_space<vmem>>, vector<8x256xf32>
    tpu.vector_store %arg2[%c0_1, %c0_2], %0 {strides = array<i32>} : memref<8x256xf32, #tpu.memory_space<vmem>>, vector<8x256xf32>,
    return
  }
  func.func @transform_0(%arg0: i32) -> (i32, i32) {
    %c0_i32 = arith.constant 0 : i32
    %c0_i32_0 = arith.constant 0 : i32
    return %arg0, %c0_i32 : i32, i32
  }
  func.func @transform_1(%arg0: i32) -> (i32, i32) {
    %c0_i32 = arith.constant 0 : i32
    %c0_i32_0 = arith.constant 0 : i32
    return %arg0, %c0_i32 : i32, i32
  }
}

</mosaic_0001>

<llo_original>
// kernel: tpu_custom_call.1
$region0: #{tpu_custom_call.1}
  #allocation0 [shape = 'u32[]', space=smem, size = 0x4, offset = 0x4, fixed_abs, tag = 'smem constant byte address 0x4 - core index']
  #allocation1 [shape = 'u32[144,128]{1,0:T(1,128)}', space=vmem, size = 0x12000, scoped, tag = 'internal scratch']
  %s0 = inlined_call_operand.hbm [shape: f32[8,256], index: 0, kind: input, shape index: {}]
  %s1 = inlined_call_operand.hbm [shape: f32[8,256], index: 1, kind: output, shape index: {}]
  %s2 = sld [smem:[#allocation0]]
  $region18: #{tpu_custom_call.1} parent=0
    _
  %s4 = ssub.s32 1, %s2
  %s5 = scalar_select 0, %s4, %s2
  $region1: #{tpu_custom_call.1} parent=0
    #allocation2 [shape = 'u8[8192]{0}', space=vmem, size = 0x2000, scoped, tag = 'input window, operand 0, single buffered']
    #allocation3 [shape = 's32[1]{0}', space=sflag, size = 0x4, scoped, tag = 'scoped memory for tpu_custom_call.1']
    #allocation4 [shape = 's32[1]{0}', space=sflag, size = 0x4, scoped, tag = 'scoped memory for tpu_custom_call.1']
    #allocation5 [shape = 'u8[8192]{0}', space=vmem, size = 0x2000, scoped, tag = 'output window, operand 0, single buffered']
    %6 = vsyncpa [#allocation3], 0
    %7 = vsyncpa [#allocation4], 0
    // Predicated region
    $region2: #{tpu_custom_call.1} parent=1 // pred_check
      _
    $region3: #{tpu_custom_call.1} parent=1 // pred_check_branch
      %9 = sbr.rel (0) target = $region5
    $region4: #{tpu_custom_call.1} parent=1 // pred_region
      %s11 = ssub.s32 256, 256
      %12 = vsyncadd [#allocation3], %s11
      %s14 = sshll.u32 [#allocation2], 4
      %s15 = int_to_ptr.vmem [resolvable:$true] %s14
      %17 = dma.hbm_to_vmem [thread:$0]  %s0, 256, %s15, [#allocation3]
    $region5: #{tpu_custom_call.1} parent=1 // pred_fallthru
      _
    // Predicated region
    $region6: #{tpu_custom_call.1} parent=1 // pred_check
      _
    $region7: #{tpu_custom_call.1} parent=1 // pred_check_branch
      %19 = sbr.rel (0) target = $region9
    $region8: #{tpu_custom_call.1} parent=1 // pred_region
      %20 = dma.done [#allocation3], 256
    $region9: #{tpu_custom_call.1} parent=1 // pred_fallthru
      _
    %v21 = vld [vmem:[#allocation2] sm:$0xff]
    %v22 = vld [vmem:[#allocation2 + $0x8] sm:$0xff]
    %23 = vst [vmem:[#allocation5] sm:$0xff] %v21
    %24 = vst [vmem:[#allocation5 + $0x8] sm:$0xff] %v22
    // Predicated region
    $region10: #{tpu_custom_call.1} parent=1 // pred_check
      _
    $region11: #{tpu_custom_call.1} parent=1 // pred_check_branch
      %26 = sbr.rel (0) target = $region13
    $region12: #{tpu_custom_call.1} parent=1 // pred_region
      %s28 = ssub.s32 256, 256
      %29 = vsyncadd [#allocation4], %s28
      %s31 = sshll.u32 [#allocation5], 4
      %s32 = int_to_ptr.vmem [resolvable:$true] %s31
      %34 = dma.vmem_to_hbm [thread:$0]  %s32, 256, %s1, [#allocation4]
    $region13: #{tpu_custom_call.1} parent=1 // pred_fallthru
      _
    // Predicated region
    $region14: #{tpu_custom_call.1} parent=1 // pred_check
      _
    $region15: #{tpu_custom_call.1} parent=1 // pred_check_branch
      %36 = sbr.rel (0) target = $region17
    $region16: #{tpu_custom_call.1} parent=1 // pred_region
      %37 = dma.done [#allocation4], 256
    $region17: #{tpu_custom_call.1} parent=1 // pred_fallthru
      _
    %38 = vsyncpa [#allocation3], 1
    %39 = vsyncpa [#allocation4], 1

</llo_original>
